<compile_context>
chip_gen: v7x
topology: tpu7x:2x2x1
jax: 0.10.0
libtpu: 0.0.40
codegen_flags: <defaults>
</compile_context>

<pallas_src>
import functools
import math

import jax
import jax.numpy as jnp
from jax.experimental import pallas as pl
from jax.experimental.pallas import tpu as pltpu


# ----------------------------------------------------------------------------
# Fused VAE kernel: encoder -> fc_mu / fc_var -> reparameterize -> decoder
# ----------------------------------------------------------------------------
def _build_vae_kernel(n_enc, n_dec):
    n_linear = n_enc + 2 + n_dec  # encoder layers, fc_mu, fc_var, decoder layers

    def kernel(x_ref, eps_ref, *refs):
        wrefs = refs[: 2 * n_linear]
        out_ref, z_ref, mu_ref, logvar_ref = refs[2 * n_linear:]

        idx = 0

        # ---- encoder ----
        h = x_ref[...]
        for _ in range(n_enc):
            w = wrefs[idx][...]
            b = wrefs[idx + 1][...]
            idx += 2
            h = jax.nn.relu(
                jnp.dot(h, w, preferred_element_type=jnp.float32) + b)

        # ---- fc_mu / fc_var ----
        wmu, bmu = wrefs[idx][...], wrefs[idx + 1][...]
        idx += 2
        wvar, bvar = wrefs[idx][...], wrefs[idx + 1][...]
        idx += 2
        mu = jnp.dot(h, wmu, preferred_element_type=jnp.float32) + bmu
        logvar = jnp.dot(h, wvar, preferred_element_type=jnp.float32) + bvar

        # ---- reparameterize ----
        std = jnp.exp(0.5 * logvar)
        z = eps_ref[...] * std + mu

        # ---- decoder ----
        d = z
        for li in range(n_dec):
            w = wrefs[idx][...]
            b = wrefs[idx + 1][...]
            idx += 2
            d = jnp.dot(d, w, preferred_element_type=jnp.float32) + b
            d = jax.nn.relu(d) if li < n_dec - 1 else jax.nn.sigmoid(d)

        out_ref[...] = d
        z_ref[...] = z
        mu_ref[...] = mu
        logvar_ref[...] = logvar

    return kernel


# ----------------------------------------------------------------------------
# Wrapper: single pallas_call, grid over batch tiles, weights resident in VMEM.
# ----------------------------------------------------------------------------
def vae_forward(params, x, eps, *, config, latent_dim, tb=8):
    B, d_in = x.shape
    assert d_in == config[0]
    assert latent_dim == config[-1], (
        "original forward() feeds z straight into the decoder (decoder_input unused), "
        "so latent_dim must equal config[-1]")

    n_enc = len(config) - 1
    n_dec = len(config) - 1

    # Pad batch to a multiple of the batch tile (sublane-friendly), slice at the end.
    Bp = pl.cdiv(B, tb) * tb
    if Bp != B:
        pad = Bp - B
        x = jnp.pad(x, ((0, pad), (0, 0)))
        eps = jnp.pad(eps, ((0, pad), (0, 0)))

    def batch_spec(d):
        return pl.BlockSpec((tb, d), lambda i: (i, 0))

    def resident_spec(arr):
        return pl.BlockSpec(arr.shape, lambda i: (0, 0))

    in_specs = [batch_spec(config[0]), batch_spec(latent_dim)]
    in_specs += [resident_spec(w) for w in params]

    out_shape = (
        jax.ShapeDtypeStruct((Bp, config[0]), jnp.float32),    # output
        jax.ShapeDtypeStruct((Bp, latent_dim), jnp.float32),   # z
        jax.ShapeDtypeStruct((Bp, latent_dim), jnp.float32),   # mu
        jax.ShapeDtypeStruct((Bp, latent_dim), jnp.float32),   # logVar
    )
    out_specs = (
        batch_spec(config[0]),
        batch_spec(latent_dim),
        batch_spec(latent_dim),
        batch_spec(latent_dim),
    )

    kernel = _build_vae_kernel(n_enc, n_dec)

    out, z, mu, logvar = pl.pallas_call(
        kernel,
        out_shape=out_shape,
        grid_spec=pltpu.PrefetchScalarGridSpec(
            num_scalar_prefetch=0,
            grid=(Bp // tb,),
            in_specs=in_specs,
            out_specs=out_specs,
        ),
        compiler_params=pltpu.CompilerParams(
            dimension_semantics=("parallel",),
        ),
    )(x, eps, *params)

    if Bp != B:
        out, z, mu, logvar = out[:B], z[:B], mu[:B], logvar[:B]
    return out, z, mu, logvar


# ----------------------------------------------------------------------------
# Parameter init (PyTorch nn.Linear default: U(-1/sqrt(fan_in), 1/sqrt(fan_in))).
# Weights are stored pre-transposed as (in, out); biases as (1, out).
# Returned as a flat list in exactly the order the kernel consumes them.
# ----------------------------------------------------------------------------
def init_params(key, config, latent_dim):
    keys = iter(jax.random.split(key, 64))

    def linear(din, dout):
        bound = 1.0 / math.sqrt(din)
        w = jax.random.uniform(next(keys), (din, dout), jnp.float32, -bound, bound)
        b = jax.random.uniform(next(keys), (1, dout), jnp.float32, -bound, bound)
        return [w, b]

    flat = []
    for i in range(1, len(config)):                 # encoder
        flat += linear(config[i - 1], config[i])
    flat += linear(config[-1], latent_dim)          # fc_mu
    flat += linear(config[-1], latent_dim)          # fc_var
    # decoder_input is defined in the PyTorch module but unused in forward(): omitted.
    for i in range(len(config) - 1, 1, -1):         # decoder hidden layers
        flat += linear(config[i], config[i - 1])
    flat += linear(config[1], config[0])            # final decoder layer (Sigmoid)
    return flat


# ----------------------------------------------------------------------------
# Pure-JAX reference (same math) for a correctness check.
# ----------------------------------------------------------------------------
def vae_reference(params, x, eps, config, latent_dim):
    n_enc = len(config) - 1
    n_dec = len(config) - 1
    idx = 0
    h = x
    for _ in range(n_enc):
        w, b = params[idx], params[idx + 1]
        idx += 2
        h = jax.nn.relu(h @ w + b)
    wmu, bmu = params[idx], params[idx + 1]
    idx += 2
    wvar, bvar = params[idx], params[idx + 1]
    idx += 2
    mu = h @ wmu + bmu
    logvar = h @ wvar + bvar
    z = eps * jnp.exp(0.5 * logvar) + mu
    d = z
    for li in range(n_dec):
        w, b = params[idx], params[idx + 1]
        idx += 2
        d = d @ w + b
        d = jax.nn.relu(d) if li < n_dec - 1 else jax.nn.sigmoid(d)
    return d, z, mu, logvar


if __name__ == "__main__":
    # Small shapes consistent with the module: config = [16, 64, 32], latent_dim = 32.
    config = [16, 64, 32]
    latent_dim = 32
    B = 8

    key = jax.random.PRNGKey(0)
    pkey, xkey, ekey = jax.random.split(key, 3)

    params = init_params(pkey, config, latent_dim)
    x = jax.random.uniform(xkey, (B, config[0]), jnp.float32)
    eps = jax.random.normal(ekey, (B, latent_dim), jnp.float32)

    fwd = jax.jit(functools.partial(
        vae_forward, config=config, latent_dim=latent_dim, tb=8))
    out, z, mu, logvar = fwd(params, x, eps)
    out = jax.block_until_ready(out)

    # Validate against the pure-JAX reference.
    r_out, r_z, r_mu, r_logvar = vae_reference(params, x, eps, config, latent_dim)
    assert out.shape == (B, config[0]) and z.shape == (B, latent_dim)
    for got, ref in ((out, r_out), (z, r_z), (mu, r_mu), (logvar, r_logvar)):
        assert jnp.allclose(got, ref, atol=2e-3, rtol=2e-3), \
            float(jnp.max(jnp.abs(got - ref)))
    assert bool(jnp.all(jnp.isfinite(out)))

    print("KERNEL_OK")
</pallas_src>

<mosaic_0001>
module attributes {stable_mosaic.version = 11 : i64} {
  func.func @kernel(%arg0: i32, %arg1: memref<8x16xf32, #tpu.memory_space<vmem>>, %arg2: memref<8x32xf32, #tpu.memory_space<vmem>>, %arg3: memref<16x64xf32, #tpu.memory_space<vmem>>, %arg4: memref<1x64xf32, #tpu.memory_space<vmem>>, %arg5: memref<64x32xf32, #tpu.memory_space<vmem>>, %arg6: memref<1x32xf32, #tpu.memory_space<vmem>>, %arg7: memref<32x32xf32, #tpu.memory_space<vmem>>, %arg8: memref<1x32xf32, #tpu.memory_space<vmem>>, %arg9: memref<32x32xf32, #tpu.memory_space<vmem>>, %arg10: memref<1x32xf32, #tpu.memory_space<vmem>>, %arg11: memref<32x64xf32, #tpu.memory_space<vmem>>, %arg12: memref<1x64xf32, #tpu.memory_space<vmem>>, %arg13: memref<64x16xf32, #tpu.memory_space<vmem>>, %arg14: memref<1x16xf32, #tpu.memory_space<vmem>>, %arg15: memref<8x16xf32, #tpu.memory_space<vmem>>, %arg16: memref<8x32xf32, #tpu.memory_space<vmem>>, %arg17: memref<8x32xf32, #tpu.memory_space<vmem>>, %arg18: memref<8x32xf32, #tpu.memory_space<vmem>>) attributes {dimension_semantics = [#tpu.dimension_semantics<parallel>], iteration_bounds = array<i64: 1>, scalar_prefetch = 0 : i64, scratch_operands = 0 : i64, tpu.core_type = #tpu.core_type<tc>, window_params = [{transform_indices = @transform_0, window_bounds = array<i64: 8, 16>}, {transform_indices = @transform_1, window_bounds = array<i64: 8, 32>}, {pipeline_mode = #tpu.pipeline_mode<synchronous>, transform_indices = @transform_2, window_bounds = array<i64: 16, 64>}, {pipeline_mode = #tpu.pipeline_mode<synchronous>, transform_indices = @transform_3, window_bounds = array<i64: 1, 64>}, {pipeline_mode = #tpu.pipeline_mode<synchronous>, transform_indices = @transform_4, window_bounds = array<i64: 64, 32>}, {pipeline_mode = #tpu.pipeline_mode<synchronous>, transform_indices = @transform_5, window_bounds = array<i64: 1, 32>}, {pipeline_mode = #tpu.pipeline_mode<synchronous>, transform_indices = @transform_6, window_bounds = array<i64: 32, 32>}, {pipeline_mode = #tpu.pipeline_mode<synchronous>, transform_indices = @transform_7, window_bounds = array<i64: 1, 32>}, {pipeline_mode = #tpu.pipeline_mode<synchronous>, transform_indices = @transform_8, window_bounds = array<i64: 32, 32>}, {pipeline_mode = #tpu.pipeline_mode<synchronous>, transform_indices = @transform_9, window_bounds = array<i64: 1, 32>}, {pipeline_mode = #tpu.pipeline_mode<synchronous>, transform_indices = @transform_10, window_bounds = array<i64: 32, 64>}, {pipeline_mode = #tpu.pipeline_mode<synchronous>, transform_indices = @transform_11, window_bounds = array<i64: 1, 64>}, {pipeline_mode = #tpu.pipeline_mode<synchronous>, transform_indices = @transform_12, window_bounds = array<i64: 64, 16>}, {pipeline_mode = #tpu.pipeline_mode<synchronous>, transform_indices = @transform_13, window_bounds = array<i64: 1, 16>}, {transform_indices = @transform_14, window_bounds = array<i64: 8, 16>}, {transform_indices = @transform_15, window_bounds = array<i64: 8, 32>}, {transform_indices = @transform_16, window_bounds = array<i64: 8, 32>}, {transform_indices = @transform_17, window_bounds = array<i64: 8, 32>}]} {
    %c0 = arith.constant 0 : index
    %c0_0 = arith.constant 0 : index
    %0 = vector.load %arg1[%c0, %c0_0] : memref<8x16xf32, #tpu.memory_space<vmem>>, vector<8x16xf32>
    %c0_1 = arith.constant 0 : index
    %c0_2 = arith.constant 0 : index
    %1 = vector.load %arg3[%c0_1, %c0_2] : memref<16x64xf32, #tpu.memory_space<vmem>>, vector<16x64xf32>
    %c0_3 = arith.constant 0 : index
    %c0_4 = arith.constant 0 : index
    %2 = vector.load %arg4[%c0_3, %c0_4] : memref<1x64xf32, #tpu.memory_space<vmem>>, vector<1x64xf32>
    %cst = arith.constant dense<0.000000e+00> : vector<8x64xf32>
    %3 = tpu.matmul %0, %1, %cst {dimension_numbers = #tpu.dot_dimension_numbers<[1], [0], [0], [1], [0, 0, 1, 1], [], []>} : vector<8x16xf32>, vector<16x64xf32>, vector<8x64xf32> -> vector<8x64xf32>
    %4 = vector.broadcast %2 : vector<1x64xf32> to vector<8x64xf32>
    %5 = arith.addf %3, %4 : vector<8x64xf32>
    %cst_5 = arith.constant 0.000000e+00 : f32
    %6 = vector.broadcast %cst_5 : f32 to vector<8x64xf32>
    %7 = arith.maximumf %5, %6 : vector<8x64xf32>
    %c0_6 = arith.constant 0 : index
    %c0_7 = arith.constant 0 : index
    %8 = vector.load %arg5[%c0_6, %c0_7] : memref<64x32xf32, #tpu.memory_space<vmem>>, vector<64x32xf32>
    %c0_8 = arith.constant 0 : index
    %c0_9 = arith.constant 0 : index
    %9 = vector.load %arg6[%c0_8, %c0_9] : memref<1x32xf32, #tpu.memory_space<vmem>>, vector<1x32xf32>
    %cst_10 = arith.constant dense<0.000000e+00> : vector<8x32xf32>
    %10 = tpu.matmul %7, %8, %cst_10 {dimension_numbers = #tpu.dot_dimension_numbers<[1], [0], [0], [1], [0, 0, 1, 1], [], []>} : vector<8x64xf32>, vector<64x32xf32>, vector<8x32xf32> -> vector<8x32xf32>
    %11 = vector.broadcast %9 : vector<1x32xf32> to vector<8x32xf32>
    %12 = arith.addf %10, %11 : vector<8x32xf32>
    %cst_11 = arith.constant 0.000000e+00 : f32
    %13 = vector.broadcast %cst_11 : f32 to vector<8x32xf32>
    %14 = arith.maximumf %12, %13 : vector<8x32xf32>
    %c0_12 = arith.constant 0 : index
    %c0_13 = arith.constant 0 : index
    %15 = vector.load %arg7[%c0_12, %c0_13] : memref<32x32xf32, #tpu.memory_space<vmem>>, vector<32x32xf32>
    %c0_14 = arith.constant 0 : index
    %c0_15 = arith.constant 0 : index
    %16 = vector.load %arg8[%c0_14, %c0_15] : memref<1x32xf32, #tpu.memory_space<vmem>>, vector<1x32xf32>
    %c0_16 = arith.constant 0 : index
    %c0_17 = arith.constant 0 : index
    %17 = vector.load %arg9[%c0_16, %c0_17] : memref<32x32xf32, #tpu.memory_space<vmem>>, vector<32x32xf32>
    %c0_18 = arith.constant 0 : index
    %c0_19 = arith.constant 0 : index
    %18 = vector.load %arg10[%c0_18, %c0_19] : memref<1x32xf32, #tpu.memory_space<vmem>>, vector<1x32xf32>
    %cst_20 = arith.constant dense<0.000000e+00> : vector<8x32xf32>
    %19 = tpu.matmul %14, %15, %cst_20 {dimension_numbers = #tpu.dot_dimension_numbers<[1], [0], [0], [1], [0, 0, 1, 1], [], []>} : vector<8x32xf32>, vector<32x32xf32>, vector<8x32xf32> -> vector<8x32xf32>
    %20 = vector.broadcast %16 : vector<1x32xf32> to vector<8x32xf32>
    %21 = arith.addf %19, %20 : vector<8x32xf32>
    %cst_21 = arith.constant dense<0.000000e+00> : vector<8x32xf32>
    %22 = tpu.matmul %14, %17, %cst_21 {dimension_numbers = #tpu.dot_dimension_numbers<[1], [0], [0], [1], [0, 0, 1, 1], [], []>} : vector<8x32xf32>, vector<32x32xf32>, vector<8x32xf32> -> vector<8x32xf32>
    %23 = vector.broadcast %18 : vector<1x32xf32> to vector<8x32xf32>
    %24 = arith.addf %22, %23 : vector<8x32xf32>
    %cst_22 = arith.constant 5.000000e-01 : f32
    %25 = vector.broadcast %cst_22 : f32 to vector<8x32xf32>
    %26 = arith.mulf %25, %24 : vector<8x32xf32>
    %27 = math.exp %26 : vector<8x32xf32>
    %c0_23 = arith.constant 0 : index
    %c0_24 = arith.constant 0 : index
    %28 = vector.load %arg2[%c0_23, %c0_24] : memref<8x32xf32, #tpu.memory_space<vmem>>, vector<8x32xf32>
    %29 = arith.mulf %28, %27 : vector<8x32xf32>
    %30 = arith.addf %29, %21 : vector<8x32xf32>
    %c0_25 = arith.constant 0 : index
    %c0_26 = arith.constant 0 : index
    %31 = vector.load %arg11[%c0_25, %c0_26] : memref<32x64xf32, #tpu.memory_space<vmem>>, vector<32x64xf32>
    %c0_27 = arith.constant 0 : index
    %c0_28 = arith.constant 0 : index
    %32 = vector.load %arg12[%c0_27, %c0_28] : memref<1x64xf32, #tpu.memory_space<vmem>>, vector<1x64xf32>
    %cst_29 = arith.constant dense<0.000000e+00> : vector<8x64xf32>
    %33 = tpu.matmul %30, %31, %cst_29 {dimension_numbers = #tpu.dot_dimension_numbers<[1], [0], [0], [1], [0, 0, 1, 1], [], []>} : vector<8x32xf32>, vector<32x64xf32>, vector<8x64xf32> -> vector<8x64xf32>
    %34 = vector.broadcast %32 : vector<1x64xf32> to vector<8x64xf32>
    %35 = arith.addf %33, %34 : vector<8x64xf32>
    %cst_30 = arith.constant 0.000000e+00 : f32
    %36 = vector.broadcast %cst_30 : f32 to vector<8x64xf32>
    %37 = arith.maximumf %35, %36 : vector<8x64xf32>
    %c0_31 = arith.constant 0 : index
    %c0_32 = arith.constant 0 : index
    %38 = vector.load %arg13[%c0_31, %c0_32] : memref<64x16xf32, #tpu.memory_space<vmem>>, vector<64x16xf32>
    %c0_33 = arith.constant 0 : index
    %c0_34 = arith.constant 0 : index
    %39 = vector.load %arg14[%c0_33, %c0_34] : memref<1x16xf32, #tpu.memory_space<vmem>>, vector<1x16xf32>
    %cst_35 = arith.constant dense<0.000000e+00> : vector<8x16xf32>
    %40 = tpu.matmul %37, %38, %cst_35 {dimension_numbers = #tpu.dot_dimension_numbers<[1], [0], [0], [1], [0, 0, 1, 1], [], []>} : vector<8x64xf32>, vector<64x16xf32>, vector<8x16xf32> -> vector<8x16xf32>
    %41 = vector.broadcast %39 : vector<1x16xf32> to vector<8x16xf32>
    %42 = arith.addf %40, %41 : vector<8x16xf32>
    %43 = arith.negf %42 : vector<8x16xf32>
    %44 = math.exp %43 : vector<8x16xf32>
    %cst_36 = arith.constant 1.000000e+00 : f32
    %45 = vector.broadcast %cst_36 : f32 to vector<8x16xf32>
    %46 = arith.addf %45, %44 : vector<8x16xf32>
    %47 = arith.divf %45, %46 : vector<8x16xf32>
    %c0_37 = arith.constant 0 : index
    %c0_38 = arith.constant 0 : index
    %48 = vector.load %arg15[%c0_37, %c0_38] : memref<8x16xf32, #tpu.memory_space<vmem>>, vector<8x16xf32>
    tpu.vector_store %arg15[%c0_37, %c0_38], %47 {strides = array<i32>} : memref<8x16xf32, #tpu.memory_space<vmem>>, vector<8x16xf32>,
    %c0_39 = arith.constant 0 : index
    %c0_40 = arith.constant 0 : index
    %49 = vector.load %arg16[%c0_39, %c0_40] : memref<8x32xf32, #tpu.memory_space<vmem>>, vector<8x32xf32>
    tpu.vector_store %arg16[%c0_39, %c0_40], %30 {strides = array<i32>} : memref<8x32xf32, #tpu.memory_space<vmem>>, vector<8x32xf32>,
    %c0_41 = arith.constant 0 : index
    %c0_42 = arith.constant 0 : index
    %50 = vector.load %arg17[%c0_41, %c0_42] : memref<8x32xf32, #tpu.memory_space<vmem>>, vector<8x32xf32>
    tpu.vector_store %arg17[%c0_41, %c0_42], %21 {strides = array<i32>} : memref<8x32xf32, #tpu.memory_space<vmem>>, vector<8x32xf32>,
    %c0_43 = arith.constant 0 : index
    %c0_44 = arith.constant 0 : index
    %51 = vector.load %arg18[%c0_43, %c0_44] : memref<8x32xf32, #tpu.memory_space<vmem>>, vector<8x32xf32>
    tpu.vector_store %arg18[%c0_43, %c0_44], %24 {strides = array<i32>} : memref<8x32xf32, #tpu.memory_space<vmem>>, vector<8x32xf32>,
    return
  }
  func.func @transform_0(%arg0: i32) -> (i32, i32) {
    %c0_i32 = arith.constant 0 : i32
    %c0_i32_0 = arith.constant 0 : i32
    return %arg0, %c0_i32 : i32, i32
  }
  func.func @transform_1(%arg0: i32) -> (i32, i32) {
    %c0_i32 = arith.constant 0 : i32
    %c0_i32_0 = arith.constant 0 : i32
    return %arg0, %c0_i32 : i32, i32
  }
  func.func @transform_2(%arg0: i32) -> (i32, i32) {
    %c0_i32 = arith.constant 0 : i32
    %c0_i32_0 = arith.constant 0 : i32
    %c0_i32_1 = arith.constant 0 : i32
    return %c0_i32, %c0_i32_0 : i32, i32
  }
  func.func @transform_3(%arg0: i32) -> (i32, i32) {
    %c0_i32 = arith.constant 0 : i32
    %c0_i32_0 = arith.constant 0 : i32
    %c0_i32_1 = arith.constant 0 : i32
    return %c0_i32, %c0_i32_0 : i32, i32
  }
  func.func @transform_4(%arg0: i32) -> (i32, i32) {
    %c0_i32 = arith.constant 0 : i32
    %c0_i32_0 = arith.constant 0 : i32
    %c0_i32_1 = arith.constant 0 : i32
    return %c0_i32, %c0_i32_0 : i32, i32
  }
  func.func @transform_5(%arg0: i32) -> (i32, i32) {
    %c0_i32 = arith.constant 0 : i32
    %c0_i32_0 = arith.constant 0 : i32
    %c0_i32_1 = arith.constant 0 : i32
    return %c0_i32, %c0_i32_0 : i32, i32
  }
  func.func @transform_6(%arg0: i32) -> (i32, i32) {
    %c0_i32 = arith.constant 0 : i32
    %c0_i32_0 = arith.constant 0 : i32
    %c0_i32_1 = arith.constant 0 : i32
    return %c0_i32, %c0_i32_0 : i32, i32
  }
  func.func @transform_7(%arg0: i32) -> (i32, i32) {
    %c0_i32 = arith.constant 0 : i32
    %c0_i32_0 = arith.constant 0 : i32
    %c0_i32_1 = arith.constant 0 : i32
    return %c0_i32, %c0_i32_0 : i32, i32
  }
  func.func @transform_8(%arg0: i32) -> (i32, i32) {
    %c0_i32 = arith.constant 0 : i32
    %c0_i32_0 = arith.constant 0 : i32
    %c0_i32_1 = arith.constant 0 : i32
    return %c0_i32, %c0_i32_0 : i32, i32
  }
  func.func @transform_9(%arg0: i32) -> (i32, i32) {
    %c0_i32 = arith.constant 0 : i32
    %c0_i32_0 = arith.constant 0 : i32
    %c0_i32_1 = arith.constant 0 : i32
    return %c0_i32, %c0_i32_0 : i32, i32
  }
  func.func @transform_10(%arg0: i32) -> (i32, i32) {
    %c0_i32 = arith.constant 0 : i32
    %c0_i32_0 = arith.constant 0 : i32
    %c0_i32_1 = arith.constant 0 : i32
    return %c0_i32, %c0_i32_0 : i32, i32
  }
  func.func @transform_11(%arg0: i32) -> (i32, i32) {
    %c0_i32 = arith.constant 0 : i32
    %c0_i32_0 = arith.constant 0 : i32
    %c0_i32_1 = arith.constant 0 : i32
    return %c0_i32, %c0_i32_0 : i32, i32
  }
  func.func @transform_12(%arg0: i32) -> (i32, i32) {
    %c0_i32 = arith.constant 0 : i32
    %c0_i32_0 = arith.constant 0 : i32
    %c0_i32_1 = arith.constant 0 : i32
    return %c0_i32, %c0_i32_0 : i32, i32
  }
  func.func @transform_13(%arg0: i32) -> (i32, i32) {
    %c0_i32 = arith.constant 0 : i32
    %c0_i32_0 = arith.constant 0 : i32
    %c0_i32_1 = arith.constant 0 : i32
    return %c0_i32, %c0_i32_0 : i32, i32
  }
  func.func @transform_14(%arg0: i32) -> (i32, i32) {
    %c0_i32 = arith.constant 0 : i32
    %c0_i32_0 = arith.constant 0 : i32
    return %arg0, %c0_i32 : i32, i32
  }
  func.func @transform_15(%arg0: i32) -> (i32, i32) {
    %c0_i32 = arith.constant 0 : i32
    %c0_i32_0 = arith.constant 0 : i32
    return %arg0, %c0_i32 : i32, i32
  }
  func.func @transform_16(%arg0: i32) -> (i32, i32) {
    %c0_i32 = arith.constant 0 : i32
    %c0_i32_0 = arith.constant 0 : i32
    return %arg0, %c0_i32 : i32, i32
  }
  func.func @transform_17(%arg0: i32) -> (i32, i32) {
    %c0_i32 = arith.constant 0 : i32
    %c0_i32_0 = arith.constant 0 : i32
    return %arg0, %c0_i32 : i32, i32
  }
}

</mosaic_0001>

<llo_original>
// kernel: vae_forward.1
$region0: #{vae_forward.1}
  #allocation0 [shape = 'u32[]', space=smem, size = 0x4, offset = 0x4, fixed_abs, tag = 'smem constant byte address 0x4 - core index']
  #allocation1 [shape = 'u32[144,128]{1,0:T(1,128)}', space=vmem, size = 0x12000, scoped, tag = 'internal scratch']
  %s0 = inlined_call_operand.vmem [shape: f32[8,16], index: 0, kind: input, shape index: {}]
  %s1 = inlined_call_operand.vmem [shape: f32[8,32], index: 1, kind: input, shape index: {}]
  %s2 = inlined_call_operand.vmem [shape: f32[16,64], index: 2, kind: input, shape index: {}]
  %s3 = inlined_call_operand.vmem [shape: f32[1,64], index: 3, kind: input, shape index: {}]
  %s4 = inlined_call_operand.vmem [shape: f32[64,32], index: 4, kind: input, shape index: {}]
  %s5 = inlined_call_operand.vmem [shape: f32[1,32], index: 5, kind: input, shape index: {}]
  %s6 = inlined_call_operand.vmem [shape: f32[32,32], index: 6, kind: input, shape index: {}]
  %s7 = inlined_call_operand.vmem [shape: f32[1,32], index: 7, kind: input, shape index: {}]
  %s8 = inlined_call_operand.vmem [shape: f32[32,32], index: 8, kind: input, shape index: {}]
  %s9 = inlined_call_operand.vmem [shape: f32[1,32], index: 9, kind: input, shape index: {}]
  %s10 = inlined_call_operand.vmem [shape: f32[32,64], index: 10, kind: input, shape index: {}]
  %s11 = inlined_call_operand.vmem [shape: f32[1,64], index: 11, kind: input, shape index: {}]
  %s12 = inlined_call_operand.vmem [shape: f32[64,16], index: 12, kind: input, shape index: {}]
  %s13 = inlined_call_operand.vmem [shape: f32[1,16], index: 13, kind: input, shape index: {}]
  %s14 = inlined_call_operand.hbm [shape: f32[8,16], index: 14, kind: output, shape index: {0}]
  %s15 = inlined_call_operand.hbm [shape: f32[8,32], index: 15, kind: output, shape index: {1}]
  %s16 = inlined_call_operand.hbm [shape: f32[8,32], index: 16, kind: output, shape index: {2}]
  %s17 = inlined_call_operand.hbm [shape: f32[8,32], index: 17, kind: output, shape index: {3}]
  %18 = xla_tuple %s14, %s15, %s16, %s17
  %s19 = sld [smem:[#allocation0]]
  $region90: #{vae_forward.1} parent=0
    _
  %s21 = ssub.s32 1, %s19
  %s22 = scalar_select 0, %s21, %s19
  $region1: #{vae_forward.1} parent=0
    #allocation2 [shape = 'u8[4096]{0}', space=vmem, size = 0x1000, scoped, tag = 'output window, operand 0, single buffered']
    #allocation3 [shape = 's32[1]{0}', space=sflag, size = 0x4, scoped, tag = 'scoped memory for vae_forward.1']
    #allocation4 [shape = 'u8[4096]{0}', space=vmem, size = 0x1000, scoped, tag = 'output window, operand 1, single buffered']
    #allocation5 [shape = 's32[1]{0}', space=sflag, size = 0x4, scoped, tag = 'scoped memory for vae_forward.1']
    #allocation6 [shape = 'u8[4096]{0}', space=vmem, size = 0x1000, scoped, tag = 'output window, operand 2, single buffered']
    #allocation7 [shape = 'u8[4096]{0}', space=vmem, size = 0x1000, scoped, tag = 'output window, operand 3, single buffered']
    #allocation8 [shape = 's32[1]{0}', space=sflag, size = 0x4, scoped, tag = 'scoped memory for vae_forward.1']
    %23 = vsyncpa [#allocation3], 0
    %24 = vsyncpa [#allocation5], 0
    %25 = vsyncpa [#allocation8], 0
    // Predicated region
    $region2: #{vae_forward.1} parent=1 // pred_check
      _
    $region3: #{vae_forward.1} parent=1 // pred_check_branch
      %27 = sbr.rel (0) target = $region5
    $region4: #{vae_forward.1} parent=1 // pred_region
      _
    $region5: #{vae_forward.1} parent=1 // pred_fallthru
      _
    // Predicated region
    $region6: #{vae_forward.1} parent=1 // pred_check
      _
    $region7: #{vae_forward.1} parent=1 // pred_check_branch
      %29 = sbr.rel (0) target = $region9
    $region8: #{vae_forward.1} parent=1 // pred_region
      _
    $region9: #{vae_forward.1} parent=1 // pred_fallthru
      _
    // Predicated region
    $region10: #{vae_forward.1} parent=1 // pred_check
      _
    $region11: #{vae_forward.1} parent=1 // pred_check_branch
      %31 = sbr.rel (0) target = $region13
    $region12: #{vae_forward.1} parent=1 // pred_region
      _
    $region13: #{vae_forward.1} parent=1 // pred_fallthru
      _
    // Predicated region
    $region14: #{vae_forward.1} parent=1 // pred_check
      _
    $region15: #{vae_forward.1} parent=1 // pred_check_branch
      %33 = sbr.rel (0) target = $region17
    $region16: #{vae_forward.1} parent=1 // pred_region
      _
    $region17: #{vae_forward.1} parent=1 // pred_fallthru
      _
    // Predicated region
    $region18: #{vae_forward.1} parent=1 // pred_check
      _
    $region19: #{vae_forward.1} parent=1 // pred_check_branch
      %35 = sbr.rel (0) target = $region21
    $region20: #{vae_forward.1} parent=1 // pred_region
      _
    $region21: #{vae_forward.1} parent=1 // pred_fallthru
      _
    // Predicated region
    $region22: #{vae_forward.1} parent=1 // pred_check
      _
    $region23: #{vae_forward.1} parent=1 // pred_check_branch
      %37 = sbr.rel (0) target = $region25
    $region24: #{vae_forward.1} parent=1 // pred_region
      _
    $region25: #{vae_forward.1} parent=1 // pred_fallthru
      _
    // Predicated region
    $region26: #{vae_forward.1} parent=1 // pred_check
      _
    $region27: #{vae_forward.1} parent=1 // pred_check_branch
      %39 = sbr.rel (0) target = $region29
    $region28: #{vae_forward.1} parent=1 // pred_region
      _
    $region29: #{vae_forward.1} parent=1 // pred_fallthru
      _
    // Predicated region
    $region30: #{vae_forward.1} parent=1 // pred_check
      _
    $region31: #{vae_forward.1} parent=1 // pred_check_branch
      %41 = sbr.rel (0) target = $region33
    $region32: #{vae_forward.1} parent=1 // pred_region
      _
    $region33: #{vae_forward.1} parent=1 // pred_fallthru
      _
    // Predicated region
    $region34: #{vae_forward.1} parent=1 // pred_check
      _
    $region35: #{vae_forward.1} parent=1 // pred_check_branch
      %43 = sbr.rel (0) target = $region37
    $region36: #{vae_forward.1} parent=1 // pred_region
      _
    $region37: #{vae_forward.1} parent=1 // pred_fallthru
      _
    // Predicated region
    $region38: #{vae_forward.1} parent=1 // pred_check
      _
    $region39: #{vae_forward.1} parent=1 // pred_check_branch
      %45 = sbr.rel (0) target = $region41
    $region40: #{vae_forward.1} parent=1 // pred_region
      _
    $region41: #{vae_forward.1} parent=1 // pred_fallthru
      _
    // Predicated region
    $region42: #{vae_forward.1} parent=1 // pred_check
      _
    $region43: #{vae_forward.1} parent=1 // pred_check_branch
      %47 = sbr.rel (0) target = $region45
    $region44: #{vae_forward.1} parent=1 // pred_region
      _
    $region45: #{vae_forward.1} parent=1 // pred_fallthru
      _
    // Predicated region
    $region46: #{vae_forward.1} parent=1 // pred_check
      _
    $region47: #{vae_forward.1} parent=1 // pred_check_branch
      %49 = sbr.rel (0) target = $region49
    $region48: #{vae_forward.1} parent=1 // pred_region
      _
    $region49: #{vae_forward.1} parent=1 // pred_fallthru
      _
    // Predicated region
    $region50: #{vae_forward.1} parent=1 // pred_check
      _
    $region51: #{vae_forward.1} parent=1 // pred_check_branch
      %51 = sbr.rel (0) target = $region53
    $region52: #{vae_forward.1} parent=1 // pred_region
      _
    $region53: #{vae_forward.1} parent=1 // pred_fallthru
      _
    // Predicated region
    $region54: #{vae_forward.1} parent=1 // pred_check
      _
    $region55: #{vae_forward.1} parent=1 // pred_check_branch
      %53 = sbr.rel (0) target = $region57
    $region56: #{vae_forward.1} parent=1 // pred_region
      _
    $region57: #{vae_forward.1} parent=1 // pred_fallthru
      _
    %v54 = vld [vmem:[%s0] sm:$0xff]
    %v55 = vld [vmem:[%s2] sm:$0xff]
    %v56 = vld [vmem:[%s2 + $0x8] sm:$0xff]
    %v57 = vld [vmem:[%s3] sm:$0x1]
    %v59 = vlaneseq
    %v60 = vshrl.u32 %v59, 7
    %v61 = vsub.s32 0, %v60
    %v62 = vrot.slane %v57, %v61
    %vm64 = vcmask 130048
    %v66 = vsel %vm64, %v54, 0
    %68 = vmatprep.subr.mxu0 0.0
    %69 = vmatpush1.msra.mxu0 %v55
    %70 = vmatprep.subr.mxu0 0.0
    %71 = vmatpush1.msra.mxu0 %v56
    %72 = vmatprep.subr.mxu0 0.0
    %73 = vmatpush1.msra.mxu0 0.0
    %74 = vmatprep.subr.mxu0 0.0
    %75 = vmatpush1.msra.mxu0 0.0
    %76 = vmatprep.subr.mxu0 0.0
    %77 = vmatpush1.msra.mxu0 0.0
    %78 = vmatprep.subr.mxu0 0.0
    %79 = vmatpush1.msra.mxu0 0.0
    %80 = vmatprep.subr.mxu0 0.0
    %81 = vmatpush1.msra.mxu0 0.0
    %82 = vmatprep.subr.mxu0 0.0
    %83 = vmatpush1.msra.mxu0 0.0
    %84 = vmatprep.subr.mxu0 0.0
    %85 = vmatpush1.msra.mxu0 0.0
    %86 = vmatprep.subr.mxu0 0.0
    %87 = vmatpush1.msra.mxu0 0.0
    %88 = vmatprep.subr.mxu0 0.0
    %89 = vmatpush1.msra.mxu0 0.0
    %90 = vmatprep.subr.mxu0 0.0
    %91 = vmatpush1.msra.mxu0 0.0
    %92 = vmatprep.subr.mxu0 0.0
    %93 = vmatpush1.msra.mxu0 0.0
    %94 = vmatprep.subr.mxu0 0.0
    %95 = vmatpush1.msra.mxu0 0.0
    %96 = vmatprep.subr.mxu0 0.0
    %97 = vmatpush1.msra.mxu0 0.0
    %98 = vmatprep.subr.mxu0 0.0
    %99 = vmatpush1.msra.mxu0 0.0
    %100 = vmatprep.subr.mxu0 0.0
    %101 = vmatpush1.msra.mxu0 0.0
    %102 = vmatprep.subr.mxu0 0.0
    %103 = vmatpush1.msra.mxu0 0.0
    %104 = vmatprep.subr.mxu0 0.0
    %105 = vmatpush1.msra.mxu0 0.0
    %106 = vmatprep.subr.mxu0 0.0
    %107 = vmatpush1.msra.mxu0 0.0
    %108 = vmatprep.subr.mxu0 0.0
    %109 = vmatpush1.msra.mxu0 0.0
    %110 = vmatprep.subr.mxu0 0.0
    %111 = vmatpush1.msra.mxu0 0.0
    %112 = vmatprep.subr.mxu0 0.0
    %113 = vmatpush1.msra.mxu0 0.0
    %114 = vmatprep.subr.mxu0 0.0
    %115 = vmatpush1.msra.mxu0 0.0
    %116 = vmatprep.subr.mxu0 0.0
    %117 = vmatpush1.msra.mxu0 0.0
    %118 = vmatprep.subr.mxu0 0.0
    %119 = vmatpush1.msra.mxu0 0.0
    %120 = vmatprep.subr.mxu0 0.0
    %121 = vmatpush1.msra.mxu0 0.0
    %122 = vmatprep.subr.mxu0 0.0
    %123 = vmatpush1.msra.mxu0 0.0
    %124 = vmatprep.subr.mxu0 0.0
    %125 = vmatpush1.msra.mxu0 0.0
    %126 = vmatprep.subr.mxu0 0.0
    %127 = vmatpush1.msra.mxu0 0.0
    %128 = vmatprep.subr.mxu0 0.0
    %129 = vmatpush1.msra.mxu0 0.0
    %130 = vmatprep.subr.mxu0 0.0
    %131 = vmatpush1.msra.mxu0 0.0
    %132 = vmatprep.mubr.f32.mxu0 0.0
    %133 = vmatmul.mubr.f32.gmra.mrb[0].mxu0 %v66
    %v134 = vpop.f32.mrb[0].mxu0
    %v135 = vadd.f32 %v62, %v134
    %v136 = vpop.f32.mrb[0].mxu0
    %137 = vdwg.mxu0
    %v138 = vmax.f32 %v135, 0.0
    %v139 = vld [vmem:[%s4] sm:$0xff]
    %v140 = vld [vmem:[%s4 + $0x8] sm:$0xff]
    %v141 = vld [vmem:[%s4 + $0x10] sm:$0xff]
    %v142 = vld [vmem:[%s4 + $0x18] sm:$0xff]
    %v143 = vld [vmem:[%s4 + $0x20] sm:$0xff]
    %v144 = vld [vmem:[%s4 + $0x28] sm:$0xff]
    %v145 = vld [vmem:[%s4 + $0x30] sm:$0xff]
    %v146 = vld [vmem:[%s4 + $0x38] sm:$0xff]
    %v147 = vld [vmem:[%s5] sm:$0x1]
    %v149 = vlaneseq
    %v150 = vshrl.u32 %v149, 7
    %v151 = vsub.s32 0, %v150
    %v152 = vrot.slane %v147, %v151
    %vm154 = vcmask 523264
    %v156 = vsel %vm154, %v138, 0
    %158 = vmatprep.subr.mxu0 0.0
    %159 = vmatpush1.msra.mxu0 %v139
    %160 = vmatprep.subr.mxu0 0.0
    %161 = vmatpush1.msra.mxu0 %v140
    %162 = vmatprep.subr.mxu0 0.0
    %163 = vmatpush1.msra.mxu0 %v141
    %164 = vmatprep.subr.mxu0 0.0
    %165 = vmatpush1.msra.mxu0 %v142
    %166 = vmatprep.subr.mxu0 0.0
    %167 = vmatpush1.msra.mxu0 %v143
    %168 = vmatprep.subr.mxu0 0.0
    %169 = vmatpush1.msra.mxu0 %v144
    %170 = vmatprep.subr.mxu0 0.0
    %171 = vmatpush1.msra.mxu0 %v145
    %172 = vmatprep.subr.mxu0 0.0
    %173 = vmatpush1.msra.mxu0 %v146
    %174 = vmatprep.subr.mxu0 0.0
    %175 = vmatpush1.msra.mxu0 0.0
    %176 = vmatprep.subr.mxu0 0.0
    %177 = vmatpush1.msra.mxu0 0.0
    %178 = vmatprep.subr.mxu0 0.0
    %179 = vmatpush1.msra.mxu0 0.0
    %180 = vmatprep.subr.mxu0 0.0
    %181 = vmatpush1.msra.mxu0 0.0
    %182 = vmatprep.subr.mxu0 0.0
    %183 = vmatpush1.msra.mxu0 0.0
    %184 = vmatprep.subr.mxu0 0.0
    %185 = vmatpush1.msra.mxu0 0.0
    %186 = vmatprep.subr.mxu0 0.0
    %187 = vmatpush1.msra.mxu0 0.0
    %188 = vmatprep.subr.mxu0 0.0
    %189 = vmatpush1.msra.mxu0 0.0
    %190 = vmatprep.subr.mxu0 0.0
    %191 = vmatpush1.msra.mxu0 0.0
    %192 = vmatprep.subr.mxu0 0.0
    %193 = vmatpush1.msra.mxu0 0.0
    %194 = vmatprep.subr.mxu0 0.0
    %195 = vmatpush1.msra.mxu0 0.0
    %196 = vmatprep.subr.mxu0 0.0
    %197 = vmatpush1.msra.mxu0 0.0
    %198 = vmatprep.subr.mxu0 0.0
    %199 = vmatpush1.msra.mxu0 0.0
    %200 = vmatprep.subr.mxu0 0.0
    %201 = vmatpush1.msra.mxu0 0.0
    %202 = vmatprep.subr.mxu0 0.0
    %203 = vmatpush1.msra.mxu0 0.0
    %204 = vmatprep.subr.mxu0 0.0
    %205 = vmatpush1.msra.mxu0 0.0
    %206 = vmatprep.subr.mxu0 0.0
    %207 = vmatpush1.msra.mxu0 0.0
    %208 = vmatprep.subr.mxu0 0.0
    %209 = vmatpush1.msra.mxu0 0.0
    %210 = vmatprep.subr.mxu0 0.0
    %211 = vmatpush1.msra.mxu0 0.0
    %212 = vmatprep.subr.mxu0 0.0
    %213 = vmatpush1.msra.mxu0 0.0
    %214 = vmatprep.subr.mxu0 0.0
    %215 = vmatpush1.msra.mxu0 0.0
    %216 = vmatprep.subr.mxu0 0.0
    %217 = vmatpush1.msra.mxu0 0.0
    %218 = vmatprep.subr.mxu0 0.0
    %219 = vmatpush1.msra.mxu0 0.0
    %220 = vmatprep.subr.mxu0 0.0
    %221 = vmatpush1.msra.mxu0 0.0
    %222 = vmatprep.mubr.f32.mxu0 0.0
    %223 = vmatmul.mubr.f32.gmra.mrb[0].mxu0 %v156
    %v224 = vpop.f32.mrb[0].mxu0
    %v225 = vadd.f32 %v152, %v224
    %v226 = vpop.f32.mrb[0].mxu0
    %227 = vdwg.mxu0
    %v228 = vmax.f32 %v225, 0.0
    %v229 = vld [vmem:[%s6] sm:$0xff]
    %v230 = vld [vmem:[%s6 + $0x8] sm:$0xff]
    %v231 = vld [vmem:[%s6 + $0x10] sm:$0xff]
    %v232 = vld [vmem:[%s6 + $0x18] sm:$0xff]
    %v233 = vld [vmem:[%s7] sm:$0x1]
    %v234 = vld [vmem:[%s8] sm:$0xff]
    %v235 = vld [vmem:[%s8 + $0x8] sm:$0xff]
    %v236 = vld [vmem:[%s8 + $0x10] sm:$0xff]
    %v237 = vld [vmem:[%s8 + $0x18] sm:$0xff]
    %v238 = vld [vmem:[%s9] sm:$0x1]
    %v240 = vlaneseq
    %v241 = vshrl.u32 %v240, 7
    %v242 = vsub.s32 0, %v241
    %v243 = vrot.slane %v233, %v242
    %vm245 = vcmask 261120
    %v247 = vsel %vm245, %v228, 0
    %249 = vmatprep.subr.mxu0 0.0
    %250 = vmatpush1.msra.mxu0 %v229
    %251 = vmatprep.subr.mxu0 0.0
    %252 = vmatpush1.msra.mxu0 %v230
    %253 = vmatprep.subr.mxu0 0.0
    %254 = vmatpush1.msra.mxu0 %v231
    %255 = vmatprep.subr.mxu0 0.0
    %256 = vmatpush1.msra.mxu0 %v232
    %257 = vmatprep.subr.mxu0 0.0
    %258 = vmatpush1.msra.mxu0 0.0
    %259 = vmatprep.subr.mxu0 0.0
    %260 = vmatpush1.msra.mxu0 0.0
    %261 = vmatprep.subr.mxu0 0.0
    %262 = vmatpush1.msra.mxu0 0.0
    %263 = vmatprep.subr.mxu0 0.0
    %264 = vmatpush1.msra.mxu0 0.0
    %265 = vmatprep.subr.mxu0 0.0
    %266 = vmatpush1.msra.mxu0 0.0
    %267 = vmatprep.subr.mxu0 0.0
    %268 = vmatpush1.msra.mxu0 0.0
    %269 = vmatprep.subr.mxu0 0.0
    %270 = vmatpush1.msra.mxu0 0.0
    %271 = vmatprep.subr.mxu0 0.0
    %272 = vmatpush1.msra.mxu0 0.0
    %273 = vmatprep.subr.mxu0 0.0
    %274 = vmatpush1.msra.mxu0 0.0
    %275 = vmatprep.subr.mxu0 0.0
    %276 = vmatpush1.msra.mxu0 0.0
    %277 = vmatprep.subr.mxu0 0.0
    %278 = vmatpush1.msra.mxu0 0.0
    %279 = vmatprep.subr.mxu0 0.0
    %280 = vmatpush1.msra.mxu0 0.0
    %281 = vmatprep.subr.mxu0 0.0
    %282 = vmatpush1.msra.mxu0 0.0
    %283 = vmatprep.subr.mxu0 0.0
    %284 = vmatpush1.msra.mxu0 0.0
    %285 = vmatprep.subr.mxu0 0.0
    %286 = vmatpush1.msra.mxu0 0.0
    %287 = vmatprep.subr.mxu0 0.0
    %288 = vmatpush1.msra.mxu0 0.0
    %289 = vmatprep.subr.mxu0 0.0
    %290 = vmatpush1.msra.mxu0 0.0
    %291 = vmatprep.subr.mxu0 0.0
    %292 = vmatpush1.msra.mxu0 0.0
    %293 = vmatprep.subr.mxu0 0.0
    %294 = vmatpush1.msra.mxu0 0.0
    %295 = vmatprep.subr.mxu0 0.0
    %296 = vmatpush1.msra.mxu0 0.0
    %297 = vmatprep.subr.mxu0 0.0
    %298 = vmatpush1.msra.mxu0 0.0
    %299 = vmatprep.subr.mxu0 0.0
    %300 = vmatpush1.msra.mxu0 0.0
    %301 = vmatprep.subr.mxu0 0.0
    %302 = vmatpush1.msra.mxu0 0.0
    %303 = vmatprep.subr.mxu0 0.0
    %304 = vmatpush1.msra.mxu0 0.0
    %305 = vmatprep.subr.mxu0 0.0
    %306 = vmatpush1.msra.mxu0 0.0
    %307 = vmatprep.subr.mxu0 0.0
    %308 = vmatpush1.msra.mxu0 0.0
    %309 = vmatprep.subr.mxu0 0.0
    %310 = vmatpush1.msra.mxu0 0.0
    %311 = vmatprep.subr.mxu0 0.0
    %312 = vmatpush1.msra.mxu0 0.0
    %313 = vmatprep.mubr.f32.mxu0 0.0
    %314 = vmatmul.mubr.f32.gmra.mrb[0].mxu0 %v247
    %v315 = vpop.f32.mrb[0].mxu0
    %v316 = vadd.f32 %v243, %v315
    %v317 = vpop.f32.mrb[0].mxu0
    %318 = vdwg.mxu0
    %v320 = vlaneseq
    %v321 = vshrl.u32 %v320, 7
    %v322 = vsub.s32 0, %v321
    %v323 = vrot.slane %v238, %v322
    %325 = vmatprep.subr.mxu0 0.0
    %326 = vmatpush1.msra.mxu0 %v234
    %327 = vmatprep.subr.mxu0 0.0
    %328 = vmatpush1.msra.mxu0 %v235
    %329 = vmatprep.subr.mxu0 0.0
    %330 = vmatpush1.msra.mxu0 %v236
    %331 = vmatprep.subr.mxu0 0.0
    %332 = vmatpush1.msra.mxu0 %v237
    %333 = vmatprep.subr.mxu0 0.0
    %334 = vmatpush1.msra.mxu0 0.0
    %335 = vmatprep.subr.mxu0 0.0
    %336 = vmatpush1.msra.mxu0 0.0
    %337 = vmatprep.subr.mxu0 0.0
    %338 = vmatpush1.msra.mxu0 0.0
    %339 = vmatprep.subr.mxu0 0.0
    %340 = vmatpush1.msra.mxu0 0.0
    %341 = vmatprep.subr.mxu0 0.0
    %342 = vmatpush1.msra.mxu0 0.0
    %343 = vmatprep.subr.mxu0 0.0
    %344 = vmatpush1.msra.mxu0 0.0
    %345 = vmatprep.subr.mxu0 0.0
    %346 = vmatpush1.msra.mxu0 0.0
    %347 = vmatprep.subr.mxu0 0.0
    %348 = vmatpush1.msra.mxu0 0.0
    %349 = vmatprep.subr.mxu0 0.0
    %350 = vmatpush1.msra.mxu0 0.0
    %351 = vmatprep.subr.mxu0 0.0
    %352 = vmatpush1.msra.mxu0 0.0
    %353 = vmatprep.subr.mxu0 0.0
    %354 = vmatpush1.msra.mxu0 0.0
    %355 = vmatprep.subr.mxu0 0.0
    %356 = vmatpush1.msra.mxu0 0.0
    %357 = vmatprep.subr.mxu0 0.0
    %358 = vmatpush1.msra.mxu0 0.0
    %359 = vmatprep.subr.mxu0 0.0
    %360 = vmatpush1.msra.mxu0 0.0
    %361 = vmatprep.subr.mxu0 0.0
    %362 = vmatpush1.msra.mxu0 0.0
    %363 = vmatprep.subr.mxu0 0.0
    %364 = vmatpush1.msra.mxu0 0.0
    %365 = vmatprep.subr.mxu0 0.0
    %366 = vmatpush1.msra.mxu0 0.0
    %367 = vmatprep.subr.mxu0 0.0
    %368 = vmatpush1.msra.mxu0 0.0
    %369 = vmatprep.subr.mxu0 0.0
    %370 = vmatpush1.msra.mxu0 0.0
    %371 = vmatprep.subr.mxu0 0.0
    %372 = vmatpush1.msra.mxu0 0.0
    %373 = vmatprep.subr.mxu0 0.0
    %374 = vmatpush1.msra.mxu0 0.0
    %375 = vmatprep.subr.mxu0 0.0
    %376 = vmatpush1.msra.mxu0 0.0
    %377 = vmatprep.subr.mxu0 0.0
    %378 = vmatpush1.msra.mxu0 0.0
    %379 = vmatprep.subr.mxu0 0.0
    %380 = vmatpush1.msra.mxu0 0.0
    %381 = vmatprep.subr.mxu0 0.0
    %382 = vmatpush1.msra.mxu0 0.0
    %383 = vmatprep.subr.mxu0 0.0
    %384 = vmatpush1.msra.mxu0 0.0
    %385 = vmatprep.subr.mxu0 0.0
    %386 = vmatpush1.msra.mxu0 0.0
    %387 = vmatprep.subr.mxu0 0.0
    %388 = vmatpush1.msra.mxu0 0.0
    %389 = vmatprep.mubr.f32.mxu0 0.0
    %390 = vmatmul.mubr.f32.gmra.mrb[0].mxu0 %v247
    %v391 = vpop.f32.mrb[0].mxu0
    %v392 = vadd.f32 %v323, %v391
    %v393 = vpop.f32.mrb[0].mxu0
    %394 = vdwg.mxu0
    %v395 = vmul.f32 %v392, 0.5
    %v396 = vmul.f32 %v395, 1.442695
    %v397 = vpow.pop %v396
    %v398 = vld [vmem:[%s1] sm:$0xff]
    %v399 = vmul.f32 %v398, %v397
    %v400 = vadd.f32 %v399, %v316
    %v401 = vld [vmem:[%s10] sm:$0xff]
    %v402 = vld [vmem:[%s10 + $0x8] sm:$0xff]
    %v403 = vld [vmem:[%s10 + $0x10] sm:$0xff]
    %v404 = vld [vmem:[%s10 + $0x18] sm:$0xff]
    %v405 = vld [vmem:[%s11] sm:$0x1]
    %v407 = vlaneseq
    %v408 = vshrl.u32 %v407, 7
    %v409 = vsub.s32 0, %v408
    %v410 = vrot.slane %v405, %v409
    %v413 = vsel %vm245, %v400, 0
    %415 = vmatprep.subr.mxu0 0.0
    %416 = vmatpush1.msra.mxu0 %v401
    %417 = vmatprep.subr.mxu0 0.0
    %418 = vmatpush1.msra.mxu0 %v402
    %419 = vmatprep.subr.mxu0 0.0
    %420 = vmatpush1.msra.mxu0 %v403
    %421 = vmatprep.subr.mxu0 0.0
    %422 = vmatpush1.msra.mxu0 %v404
    %423 = vmatprep.subr.mxu0 0.0
    %424 = vmatpush1.msra.mxu0 0.0
    %425 = vmatprep.subr.mxu0 0.0
    %426 = vmatpush1.msra.mxu0 0.0
    %427 = vmatprep.subr.mxu0 0.0
    %428 = vmatpush1.msra.mxu0 0.0
    %429 = vmatprep.subr.mxu0 0.0
    %430 = vmatpush1.msra.mxu0 0.0
    %431 = vmatprep.subr.mxu0 0.0
    %432 = vmatpush1.msra.mxu0 0.0
    %433 = vmatprep.subr.mxu0 0.0
    %434 = vmatpush1.msra.mxu0 0.0
    %435 = vmatprep.subr.mxu0 0.0
    %436 = vmatpush1.msra.mxu0 0.0
    %437 = vmatprep.subr.mxu0 0.0
    %438 = vmatpush1.msra.mxu0 0.0
    %439 = vmatprep.subr.mxu0 0.0
    %440 = vmatpush1.msra.mxu0 0.0
    %441 = vmatprep.subr.mxu0 0.0
    %442 = vmatpush1.msra.mxu0 0.0
    %443 = vmatprep.subr.mxu0 0.0
    %444 = vmatpush1.msra.mxu0 0.0
    %445 = vmatprep.subr.mxu0 0.0
    %446 = vmatpush1.msra.mxu0 0.0
    %447 = vmatprep.subr.mxu0 0.0
    %448 = vmatpush1.msra.mxu0 0.0
    %449 = vmatprep.subr.mxu0 0.0
    %450 = vmatpush1.msra.mxu0 0.0
    %451 = vmatprep.subr.mxu0 0.0
    %452 = vmatpush1.msra.mxu0 0.0
    %453 = vmatprep.subr.mxu0 0.0
    %454 = vmatpush1.msra.mxu0 0.0
    %455 = vmatprep.subr.mxu0 0.0
    %456 = vmatpush1.msra.mxu0 0.0
    %457 = vmatprep.subr.mxu0 0.0
    %458 = vmatpush1.msra.mxu0 0.0
    %459 = vmatprep.subr.mxu0 0.0
    %460 = vmatpush1.msra.mxu0 0.0
    %461 = vmatprep.subr.mxu0 0.0
    %462 = vmatpush1.msra.mxu0 0.0
    %463 = vmatprep.subr.mxu0 0.0
    %464 = vmatpush1.msra.mxu0 0.0
    %465 = vmatprep.subr.mxu0 0.0
    %466 = vmatpush1.msra.mxu0 0.0
    %467 = vmatprep.subr.mxu0 0.0
    %468 = vmatpush1.msra.mxu0 0.0
    %469 = vmatprep.subr.mxu0 0.0
    %470 = vmatpush1.msra.mxu0 0.0
    %471 = vmatprep.subr.mxu0 0.0
    %472 = vmatpush1.msra.mxu0 0.0
    %473 = vmatprep.subr.mxu0 0.0
    %474 = vmatpush1.msra.mxu0 0.0
    %475 = vmatprep.subr.mxu0 0.0
    %476 = vmatpush1.msra.mxu0 0.0
    %477 = vmatprep.subr.mxu0 0.0
    %478 = vmatpush1.msra.mxu0 0.0
    %479 = vmatprep.mubr.f32.mxu0 0.0
    %480 = vmatmul.mubr.f32.gmra.mrb[0].mxu0 %v413
    %v481 = vpop.f32.mrb[0].mxu0
    %v482 = vadd.f32 %v410, %v481
    %v483 = vpop.f32.mrb[0].mxu0
    %484 = vdwg.mxu0
    %v485 = vmax.f32 %v482, 0.0
    %v486 = vld [vmem:[%s12] sm:$0xff]
    %v487 = vld [vmem:[%s12 + $0x8] sm:$0xff]
    %v488 = vld [vmem:[%s12 + $0x10] sm:$0xff]
    %v489 = vld [vmem:[%s12 + $0x18] sm:$0xff]
    %v490 = vld [vmem:[%s12 + $0x20] sm:$0xff]
    %v491 = vld [vmem:[%s12 + $0x28] sm:$0xff]
    %v492 = vld [vmem:[%s12 + $0x30] sm:$0xff]
    %v493 = vld [vmem:[%s12 + $0x38] sm:$0xff]
    %v494 = vld [vmem:[%s13] sm:$0x1]
    %v496 = vlaneseq
    %v497 = vshrl.u32 %v496, 7
    %v498 = vsub.s32 0, %v497
    %v499 = vrot.slane %v494, %v498
    %v502 = vsel %vm154, %v485, 0
    %504 = vmatprep.subr.mxu0 0.0
    %505 = vmatpush1.msra.mxu0 %v486
    %506 = vmatprep.subr.mxu0 0.0
    %507 = vmatpush1.msra.mxu0 %v487
    %508 = vmatprep.subr.mxu0 0.0
    %509 = vmatpush1.msra.mxu0 %v488
    %510 = vmatprep.subr.mxu0 0.0
    %511 = vmatpush1.msra.mxu0 %v489
    %512 = vmatprep.subr.mxu0 0.0
    %513 = vmatpush1.msra.mxu0 %v490
    %514 = vmatprep.subr.mxu0 0.0
    %515 = vmatpush1.msra.mxu0 %v491
    %516 = vmatprep.subr.mxu0 0.0
    %517 = vmatpush1.msra.mxu0 %v492
    %518 = vmatprep.subr.mxu0 0.0
    %519 = vmatpush1.msra.mxu0 %v493
    %520 = vmatprep.subr.mxu0 0.0
    %521 = vmatpush1.msra.mxu0 0.0
    %522 = vmatprep.subr.mxu0 0.0
    %523 = vmatpush1.msra.mxu0 0.0
    %524 = vmatprep.subr.mxu0 0.0
    %525 = vmatpush1.msra.mxu0 0.0
    %526 = vmatprep.subr.mxu0 0.0
    %527 = vmatpush1.msra.mxu0 0.0
    %528 = vmatprep.subr.mxu0 0.0
    %529 = vmatpush1.msra.mxu0 0.0
    %530 = vmatprep.subr.mxu0 0.0
    %531 = vmatpush1.msra.mxu0 0.0
    %532 = vmatprep.subr.mxu0 0.0
    %533 = vmatpush1.msra.mxu0 0.0
    %534 = vmatprep.subr.mxu0 0.0
    %535 = vmatpush1.msra.mxu0 0.0
    %536 = vmatprep.subr.mxu0 0.0
    %537 = vmatpush1.msra.mxu0 0.0
    %538 = vmatprep.subr.mxu0 0.0
    %539 = vmatpush1.msra.mxu0 0.0
    %540 = vmatprep.subr.mxu0 0.0
    %541 = vmatpush1.msra.mxu0 0.0
    %542 = vmatprep.subr.mxu0 0.0
    %543 = vmatpush1.msra.mxu0 0.0
    %544 = vmatprep.subr.mxu0 0.0
    %545 = vmatpush1.msra.mxu0 0.0
    %546 = vmatprep.subr.mxu0 0.0
    %547 = vmatpush1.msra.mxu0 0.0
    %548 = vmatprep.subr.mxu0 0.0
    %549 = vmatpush1.msra.mxu0 0.0
    %550 = vmatprep.subr.mxu0 0.0
    %551 = vmatpush1.msra.mxu0 0.0
    %552 = vmatprep.subr.mxu0 0.0
    %553 = vmatpush1.msra.mxu0 0.0
    %554 = vmatprep.subr.mxu0 0.0
    %555 = vmatpush1.msra.mxu0 0.0
    %556 = vmatprep.subr.mxu0 0.0
    %557 = vmatpush1.msra.mxu0 0.0
    %558 = vmatprep.subr.mxu0 0.0
    %559 = vmatpush1.msra.mxu0 0.0
    %560 = vmatprep.subr.mxu0 0.0
    %561 = vmatpush1.msra.mxu0 0.0
    %562 = vmatprep.subr.mxu0 0.0
    %563 = vmatpush1.msra.mxu0 0.0
    %564 = vmatprep.subr.mxu0 0.0
    %565 = vmatpush1.msra.mxu0 0.0
    %566 = vmatprep.subr.mxu0 0.0
    %567 = vmatpush1.msra.mxu0 0.0
    %568 = vmatprep.mubr.f32.mxu0 0.0
    %569 = vmatmul.mubr.f32.gmra.mrb[0].mxu0 %v502
    %v570 = vpop.f32.mrb[0].mxu0
    %v571 = vadd.f32 %v499, %v570
    %v572 = vpop.f32.mrb[0].mxu0
    %573 = vdwg.mxu0
    %v574 = vxor.u32 %v571, 2147483648
    %v575 = vmul.f32 %v574, 1.442695
    %v576 = vpow.pop %v575
    %v577 = vadd.f32 %v576, 1.0
    %v578 = vrcp.pop %v577
    %v579 = vmul.f32 1.0, %v578
    %580 = vst.msk [vmem:[#allocation2] sm:$0xff] %vm64, %v579
    %581 = vst.msk [vmem:[#allocation4] sm:$0xff] %vm245, %v400
    %582 = vst.msk [vmem:[#allocation6] sm:$0xff] %vm245, %v316
    %583 = vst.msk [vmem:[#allocation7] sm:$0xff] %vm245, %v392
    // Predicated region
    $region58: #{vae_forward.1} parent=1 // pred_check
      _
    $region59: #{vae_forward.1} parent=1 // pred_check_branch
      %585 = sbr.rel (0) target = $region61
    $region60: #{vae_forward.1} parent=1 // pred_region
      %s587 = ssub.s32 128, 128
      %588 = vsyncadd [#allocation3], %s587
      %s590 = sshll.u32 [#allocation2], 4
      %s591 = int_to_ptr.vmem [resolvable:$true] %s590
      %593 = dma.vmem_to_hbm [thread:$0]  %s591, 128, %s14, [#allocation3]
    $region61: #{vae_forward.1} parent=1 // pred_fallthru
      _
    // Predicated region
    $region62: #{vae_forward.1} parent=1 // pred_check
      _
    $region63: #{vae_forward.1} parent=1 // pred_check_branch
      %595 = sbr.rel (0) target = $region65
    $region64: #{vae_forward.1} parent=1 // pred_region
      %s597 = ssub.s32 128, 128
      %598 = vsyncadd [#allocation5], %s597
      %s600 = sshll.u32 [#allocation4], 4
      %s601 = int_to_ptr.vmem [resolvable:$true] %s600
      %603 = dma.vmem_to_hbm [thread:$0]  %s601, 128, %s15, [#allocation5]
    $region65: #{vae_forward.1} parent=1 // pred_fallthru
      _
    // Predicated region
    $region66: #{vae_forward.1} parent=1 // pred_check
      _
    $region67: #{vae_forward.1} parent=1 // pred_check_branch
      %605 = sbr.rel (0) target = $region69
    $region68: #{vae_forward.1} parent=1 // pred_region
      %s607 = ssub.s32 128, 128
      %608 = vsyncadd [#allocation5], %s607
      %s610 = sshll.u32 [#allocation6], 4
      %s611 = int_to_ptr.vmem [resolvable:$true] %s610
      %613 = dma.vmem_to_hbm [thread:$0]  %s611, 128, %s16, [#allocation5]
    $region69: #{vae_forward.1} parent=1 // pred_fallthru
      _
    // Predicated region
    $region70: #{vae_forward.1} parent=1 // pred_check
      _
    $region71: #{vae_forward.1} parent=1 // pred_check_branch
      %615 = sbr.rel (0) target = $region73
    $region72: #{vae_forward.1} parent=1 // pred_region
      %s617 = ssub.s32 128, 128
      %618 = vsyncadd [#allocation8], %s617
      %s620 = sshll.u32 [#allocation7], 4
      %s621 = int_to_ptr.vmem [resolvable:$true] %s620
      %623 = dma.vmem_to_hbm [thread:$0]  %s621, 128, %s17, [#allocation8]
    $region73: #{vae_forward.1} parent=1 // pred_fallthru
      _
    // Predicated region
    $region74: #{vae_forward.1} parent=1 // pred_check
      _
    $region75: #{vae_forward.1} parent=1 // pred_check_branch
      %625 = sbr.rel (0) target = $region77
    $region76: #{vae_forward.1} parent=1 // pred_region
      %626 = dma.done [#allocation3], 128
    $region77: #{vae_forward.1} parent=1 // pred_fallthru
      _
    // Predicated region
    $region78: #{vae_forward.1} parent=1 // pred_check
      _
    $region79: #{vae_forward.1} parent=1 // pred_check_branch
      %628 = sbr.rel (0) target = $region81
    $region80: #{vae_forward.1} parent=1 // pred_region
      %629 = dma.done [#allocation5], 128
    $region81: #{vae_forward.1} parent=1 // pred_fallthru
      _
    // Predicated region
    $region82: #{vae_forward.1} parent=1 // pred_check
      _
    $region83: #{vae_forward.1} parent=1 // pred_check_branch
      %631 = sbr.rel (0) target = $region85
    $region84: #{vae_forward.1} parent=1 // pred_region
      %632 = dma.done [#allocation5], 128
    $region85: #{vae_forward.1} parent=1 // pred_fallthru
      _
    // Predicated region
    $region86: #{vae_forward.1} parent=1 // pred_check
      _
    $region87: #{vae_forward.1} parent=1 // pred_check_branch
      %634 = sbr.rel (0) target = $region89
    $region88: #{vae_forward.1} parent=1 // pred_region
      %635 = dma.done [#allocation8], 128
    $region89: #{vae_forward.1} parent=1 // pred_fallthru
      _
    %636 = vsyncpa [#allocation3], 1
    %637 = vsyncpa [#allocation5], 1
    %638 = vsyncpa [#allocation8], 1

</llo_original>
